<compile_context>
chip_gen: v7x
topology: tpu7x:2x2x1
jax: 0.10.0
libtpu: 0.0.40
codegen_flags: <defaults>
</compile_context>

<pallas_src>
import functools
import math

import jax
import jax.numpy as jnp
from jax.experimental import pallas as pl
from jax.experimental.pallas import tpu as pltpu

NUM_LOOP_CLASSES = 4   # the PyTorch forward hard-codes `for i in range(4)`
LANES = 128


def _cdiv(a, b):
    return -(-a // b)


def _dice_kernel(pred_ref, tgt_ref, loss_ref, acc_gy, acc_g2, acc_y2, *,
                 epsilon, num_classes):
    """Grid = (B, R // TR); batch axis is 'parallel', reduction axis is inner.

    pred_ref/tgt_ref : (4, TR, 128) VMEM tiles of the (B, C, R, 128) inputs
                       (batch dim squeezed; channel-block 0 = classes 0..3).
    loss_ref         : (8, 128) VMEM block of the (B, 8, 128) output; the
                       per-batch loss is broadcast across the full block so
                       the final store is an unmasked, lane-dense vst.
    acc_*            : (4, 128) VMEM scratch; per-class, per-lane partial sums
                       of G*Y, G^2 and Y^2 (reset at k==0, finalized at last k).
    """
    k = pl.program_id(1)

    @pl.when(k == 0)
    def _():
        acc_gy[...] = jnp.zeros_like(acc_gy)
        acc_g2[...] = jnp.zeros_like(acc_g2)
        acc_y2[...] = jnp.zeros_like(acc_y2)

    g = pred_ref[...].astype(jnp.float32)   # (4, TR, 128)
    y = tgt_ref[...].astype(jnp.float32)    # (4, TR, 128)

    # Collapse only the row (sublane) axis -> (4, 128) per-lane partials.
    # This is dominated by VPU vreg-adds; the accumulator stays 128 lanes
    # wide so there are no narrow masked stores in the hot loop.
    acc_gy[...] += jnp.sum(g * y, axis=1)
    acc_g2[...] += jnp.sum(g * g, axis=1)
    acc_y2[...] += jnp.sum(y * y, axis=1)

    @pl.when(k == pl.num_programs(1) - 1)
    def _():
        sgy = jnp.sum(acc_gy[...], axis=1, keepdims=True)   # (4, 1)
        sg2 = jnp.sum(acc_g2[...], axis=1, keepdims=True)   # (4, 1)
        sy2 = jnp.sum(acc_y2[...], axis=1, keepdims=True)   # (4, 1)
        num = sgy + epsilon
        den = sg2 + sy2 + epsilon
        ratio_sum = jnp.sum(num / den)                       # sum over 4 classes
        loss = 1.0 - (2.0 / num_classes) * ratio_sum
        loss_ref[...] = jnp.broadcast_to(loss, loss_ref.shape).astype(loss_ref.dtype)


def dice_loss(output, target, *, epsilon, num_classes, tile_rows=512):
    """output, target: (B, C, D, H, W) arrays (NCDHW), C >= 4.

    tile_rows: rows of 128 lanes per grid step and class.  Default 512 gives
    a (4, 512, 128) f32 tile = 1 MiB per input buffer; with double buffering
    that is ~4 MiB of VMEM, which fits the default scoped-VMEM limit on every
    TPU generation (incl. v7x's smaller 64 MiB physical VMEM) while being
    large enough that the ~0.35 us per-grid-step overhead is amortized.
    """
    B, C = output.shape[0], output.shape[1]
    assert C >= NUM_LOOP_CLASSES, "forward pass reads the first 4 class channels"
    assert output.shape == target.shape
    N = math.prod(output.shape[2:])

    # Flatten spatial dims; keep all C channels (BlockSpec selects the first 4,
    # avoiding a wrapper-side slice copy when C > 4).
    out_flat = output.reshape(B, C, N)
    tgt_flat = target.reshape(B, C, N)

    # Lane-pack: N -> (R, 128).  Zero-pad only if necessary (zeros contribute
    # nothing to any of the three sums, so semantics are unchanged).
    R = _cdiv(N, LANES)
    tr = min(tile_rows, R)
    if tr < R:
        tr = max(8, (tr // 8) * 8)       # full 8-sublane vregs when tiling
    r_pad = _cdiv(R, tr) * tr
    n_pad = r_pad * LANES
    if n_pad != N:
        pad = ((0, 0), (0, 0), (0, n_pad - N))
        out_flat = jnp.pad(out_flat, pad)
        tgt_flat = jnp.pad(tgt_flat, pad)
    out4 = out_flat.reshape(B, C, r_pad, LANES)
    tgt4 = tgt_flat.reshape(B, C, r_pad, LANES)

    kernel = functools.partial(
        _dice_kernel, epsilon=float(epsilon), num_classes=float(num_classes)
    )

    in_spec = lambda: pl.BlockSpec(
        (None, NUM_LOOP_CLASSES, tr, LANES),        # batch dim squeezed
        lambda b, k: (b, 0, k, 0),                  # channel-block 0 = classes 0..3
    )
    out_spec = pl.BlockSpec((None, 8, LANES), lambda b, k: (b, 0, 0))

    per_batch = pl.pallas_call(
        kernel,
        out_shape=jax.ShapeDtypeStruct((B, 8, LANES), jnp.float32),
        grid_spec=pltpu.PrefetchScalarGridSpec(
            num_scalar_prefetch=0,
            grid=(B, r_pad // tr),
            in_specs=[in_spec(), in_spec()],
            out_specs=out_spec,
            scratch_shapes=[
                pltpu.VMEM((NUM_LOOP_CLASSES, LANES), jnp.float32),
                pltpu.VMEM((NUM_LOOP_CLASSES, LANES), jnp.float32),
                pltpu.VMEM((NUM_LOOP_CLASSES, LANES), jnp.float32),
            ],
        ),
        compiler_params=pltpu.CompilerParams(
            # Batch axis parallel (second TensorCore on v7x), reduction axis
            # sequential.  Harmless on single-TC v5e/v6e.
            dimension_semantics=("parallel", "arbitrary"),
        ),
    )(out4, tgt4)

    # Final `.mean()` over the batch is trivial glue.
    return jnp.mean(per_batch[:, 0, 0])


def dice_loss_ref(output, target, *, epsilon, num_classes):
    """Pure-JAX reference mirroring the PyTorch forward."""
    B = output.shape[0]
    total = 0.0
    for i in range(NUM_LOOP_CLASSES):
        G = output[:, i].reshape(B, -1).astype(jnp.float32)
        Y = target[:, i].reshape(B, -1).astype(jnp.float32)
        num = jnp.sum(G * Y, axis=1) + epsilon
        den = jnp.sum(G * G, axis=1) + jnp.sum(Y * Y, axis=1) + epsilon
        total = total + num / den
    return jnp.mean(1.0 - 2.0 / num_classes * total)


if __name__ == "__main__":
    config = {"loss_epsilon": 1e-6, "num_classes": 4}
    key = jax.random.PRNGKey(0)
    k1, k2, k3, k4 = jax.random.split(key, 4)

    # Case 1: canonical shape (B=2, C=4, 8^3 volume).
    B, C, D, H, W = 2, 4, 8, 8, 8
    output = jax.nn.softmax(jax.random.normal(k1, (B, C, D, H, W), jnp.float32), axis=1)
    target = (jax.random.uniform(k2, (B, C, D, H, W), jnp.float32) > 0.5).astype(jnp.float32)

    loss = dice_loss(
        output, target,
        epsilon=config["loss_epsilon"], num_classes=config["num_classes"],
    )
    loss = jax.block_until_ready(loss)
    ref = dice_loss_ref(
        output, target,
        epsilon=config["loss_epsilon"], num_classes=config["num_classes"],
    )
    assert jnp.allclose(loss, ref, rtol=1e-5, atol=1e-6), (loss, ref)

    # Case 2: C > 4 (extra channels selected away by the BlockSpec, no slice
    # copy) and a spatial size that is not a multiple of 128 (zero-pad path).
    B2, C2, D2, H2, W2 = 2, 6, 5, 6, 7
    out2 = jax.nn.softmax(jax.random.normal(k3, (B2, C2, D2, H2, W2), jnp.float32), axis=1)
    tgt2 = (jax.random.uniform(k4, (B2, C2, D2, H2, W2), jnp.float32) > 0.5).astype(jnp.float32)

    loss2 = jax.block_until_ready(dice_loss(
        out2, tgt2,
        epsilon=config["loss_epsilon"], num_classes=config["num_classes"],
    ))
    ref2 = dice_loss_ref(
        out2, tgt2,
        epsilon=config["loss_epsilon"], num_classes=config["num_classes"],
    )
    assert jnp.allclose(loss2, ref2, rtol=1e-5, atol=1e-6), (loss2, ref2)

    print("KERNEL_OK")
</pallas_src>

<mosaic_0001>
module attributes {stable_mosaic.version = 11 : i64} {
  func.func @_dice_kernel(%arg0: i32, %arg1: i32, %arg2: memref<1x4x4x128xf32, #tpu.memory_space<vmem>>, %arg3: memref<1x4x4x128xf32, #tpu.memory_space<vmem>>, %arg4: memref<1x8x128xf32, #tpu.memory_space<vmem>>, %arg5: memref<4x128xf32, #tpu.memory_space<vmem>>, %arg6: memref<4x128xf32, #tpu.memory_space<vmem>>, %arg7: memref<4x128xf32, #tpu.memory_space<vmem>>) attributes {dimension_semantics = [#tpu.dimension_semantics<parallel>, #tpu.dimension_semantics<arbitrary>], iteration_bounds = array<i64: 2, 1>, scalar_prefetch = 0 : i64, scratch_operands = 3 : i64, tpu.core_type = #tpu.core_type<tc>, window_params = [{transform_indices = @transform_0, window_bounds = array<i64: 1, 4, 4, 128>}, {transform_indices = @transform_1, window_bounds = array<i64: 1, 4, 4, 128>}, {transform_indices = @transform_2, window_bounds = array<i64: 1, 8, 128>}]} {
    %c0_i32 = arith.constant 0 : i32
    %0 = arith.cmpi eq, %arg1, %c0_i32 : i32
    %1 = arith.extui %0 : i1 to i32
    %c0_i32_0 = arith.constant 0 : i32
    %2 = arith.cmpi ne, %1, %c0_i32_0 : i32
    scf.if %2 {
      %cst_24 = arith.constant 0.000000e+00 : f32
      %25 = vector.broadcast %cst_24 : f32 to vector<4x128xf32>
      %c0_25 = arith.constant 0 : index
      %c0_26 = arith.constant 0 : index
      %26 = vector.load %arg5[%c0_25, %c0_26] : memref<4x128xf32, #tpu.memory_space<vmem>>, vector<4x128xf32>
      tpu.vector_store %arg5[%c0_25, %c0_26], %25 {strides = array<i32>} : memref<4x128xf32, #tpu.memory_space<vmem>>, vector<4x128xf32>,
      %cst_27 = arith.constant 0.000000e+00 : f32
      %27 = vector.broadcast %cst_27 : f32 to vector<4x128xf32>
      %c0_28 = arith.constant 0 : index
      %c0_29 = arith.constant 0 : index
      %28 = vector.load %arg6[%c0_28, %c0_29] : memref<4x128xf32, #tpu.memory_space<vmem>>, vector<4x128xf32>
      tpu.vector_store %arg6[%c0_28, %c0_29], %27 {strides = array<i32>} : memref<4x128xf32, #tpu.memory_space<vmem>>, vector<4x128xf32>,
      %cst_30 = arith.constant 0.000000e+00 : f32
      %29 = vector.broadcast %cst_30 : f32 to vector<4x128xf32>
      %c0_31 = arith.constant 0 : index
      %c0_32 = arith.constant 0 : index
      %30 = vector.load %arg7[%c0_31, %c0_32] : memref<4x128xf32, #tpu.memory_space<vmem>>, vector<4x128xf32>
      tpu.vector_store %arg7[%c0_31, %c0_32], %29 {strides = array<i32>} : memref<4x128xf32, #tpu.memory_space<vmem>>, vector<4x128xf32>,
    } else {
    }
    %c0 = arith.constant 0 : index
    %c0_1 = arith.constant 0 : index
    %c0_2 = arith.constant 0 : index
    %c0_3 = arith.constant 0 : index
    %3 = vector.load %arg2[%c0, %c0_1, %c0_2, %c0_3] : memref<1x4x4x128xf32, #tpu.memory_space<vmem>>, vector<1x4x4x128xf32>
    %4 = vector.shape_cast %3 : vector<1x4x4x128xf32> to vector<4x4x128xf32>
    %c0_4 = arith.constant 0 : index
    %c0_5 = arith.constant 0 : index
    %c0_6 = arith.constant 0 : index
    %c0_7 = arith.constant 0 : index
    %5 = vector.load %arg3[%c0_4, %c0_5, %c0_6, %c0_7] : memref<1x4x4x128xf32, #tpu.memory_space<vmem>>, vector<1x4x4x128xf32>
    %6 = vector.shape_cast %5 : vector<1x4x4x128xf32> to vector<4x4x128xf32>
    %c0_8 = arith.constant 0 : index
    %c0_9 = arith.constant 0 : index
    %7 = vector.load %arg5[%c0_8, %c0_9] : memref<4x128xf32, #tpu.memory_space<vmem>>, vector<4x128xf32>
    %8 = arith.mulf %4, %6 : vector<4x4x128xf32>
    %cst = arith.constant dense<0.000000e+00> : vector<4x128xf32>
    %9 = vector.multi_reduction <add>, %8, %cst [1] : vector<4x4x128xf32> to vector<4x128xf32>
    %10 = arith.addf %7, %9 : vector<4x128xf32>
    %c0_10 = arith.constant 0 : index
    %c0_11 = arith.constant 0 : index
    %11 = vector.load %arg5[%c0_10, %c0_11] : memref<4x128xf32, #tpu.memory_space<vmem>>, vector<4x128xf32>
    tpu.vector_store %arg5[%c0_10, %c0_11], %10 {strides = array<i32>} : memref<4x128xf32, #tpu.memory_space<vmem>>, vector<4x128xf32>,
    %c0_12 = arith.constant 0 : index
    %c0_13 = arith.constant 0 : index
    %12 = vector.load %arg6[%c0_12, %c0_13] : memref<4x128xf32, #tpu.memory_space<vmem>>, vector<4x128xf32>
    %13 = arith.mulf %4, %4 : vector<4x4x128xf32>
    %cst_14 = arith.constant dense<0.000000e+00> : vector<4x128xf32>
    %14 = vector.multi_reduction <add>, %13, %cst_14 [1] : vector<4x4x128xf32> to vector<4x128xf32>
    %15 = arith.addf %12, %14 : vector<4x128xf32>
    %c0_15 = arith.constant 0 : index
    %c0_16 = arith.constant 0 : index
    %16 = vector.load %arg6[%c0_15, %c0_16] : memref<4x128xf32, #tpu.memory_space<vmem>>, vector<4x128xf32>
    tpu.vector_store %arg6[%c0_15, %c0_16], %15 {strides = array<i32>} : memref<4x128xf32, #tpu.memory_space<vmem>>, vector<4x128xf32>,
    %c0_17 = arith.constant 0 : index
    %c0_18 = arith.constant 0 : index
    %17 = vector.load %arg7[%c0_17, %c0_18] : memref<4x128xf32, #tpu.memory_space<vmem>>, vector<4x128xf32>
    %18 = arith.mulf %6, %6 : vector<4x4x128xf32>
    %cst_19 = arith.constant dense<0.000000e+00> : vector<4x128xf32>
    %19 = vector.multi_reduction <add>, %18, %cst_19 [1] : vector<4x4x128xf32> to vector<4x128xf32>
    %20 = arith.addf %17, %19 : vector<4x128xf32>
    %c0_20 = arith.constant 0 : index
    %c0_21 = arith.constant 0 : index
    %21 = vector.load %arg7[%c0_20, %c0_21] : memref<4x128xf32, #tpu.memory_space<vmem>>, vector<4x128xf32>
    tpu.vector_store %arg7[%c0_20, %c0_21], %20 {strides = array<i32>} : memref<4x128xf32, #tpu.memory_space<vmem>>, vector<4x128xf32>,
    %c0_i32_22 = arith.constant 0 : i32
    %22 = arith.cmpi eq, %arg1, %c0_i32_22 : i32
    %23 = arith.extui %22 : i1 to i32
    %c0_i32_23 = arith.constant 0 : i32
    %24 = arith.cmpi ne, %23, %c0_i32_23 : i32
    scf.if %24 {
      %c0_24 = arith.constant 0 : index
      %c0_25 = arith.constant 0 : index
      %25 = vector.load %arg5[%c0_24, %c0_25] : memref<4x128xf32, #tpu.memory_space<vmem>>, vector<4x128xf32>
      %cst_26 = arith.constant dense<0.000000e+00> : vector<4xf32>
      %26 = vector.multi_reduction <add>, %25, %cst_26 [1] : vector<4x128xf32> to vector<4xf32>
      %27 = vector.shape_cast %26 : vector<4xf32> to vector<4x1xf32>
      %c0_27 = arith.constant 0 : index
      %c0_28 = arith.constant 0 : index
      %28 = vector.load %arg6[%c0_27, %c0_28] : memref<4x128xf32, #tpu.memory_space<vmem>>, vector<4x128xf32>
      %cst_29 = arith.constant dense<0.000000e+00> : vector<4xf32>
      %29 = vector.multi_reduction <add>, %28, %cst_29 [1] : vector<4x128xf32> to vector<4xf32>
      %30 = vector.shape_cast %29 : vector<4xf32> to vector<4x1xf32>
      %c0_30 = arith.constant 0 : index
      %c0_31 = arith.constant 0 : index
      %31 = vector.load %arg7[%c0_30, %c0_31] : memref<4x128xf32, #tpu.memory_space<vmem>>, vector<4x128xf32>
      %cst_32 = arith.constant dense<0.000000e+00> : vector<4xf32>
      %32 = vector.multi_reduction <add>, %31, %cst_32 [1] : vector<4x128xf32> to vector<4xf32>
      %33 = vector.shape_cast %32 : vector<4xf32> to vector<4x1xf32>
      %cst_33 = arith.constant 9.99999997E-7 : f32
      %34 = vector.broadcast %cst_33 : f32 to vector<4x1xf32>
      %35 = arith.addf %27, %34 : vector<4x1xf32>
      %36 = arith.addf %30, %33 : vector<4x1xf32>
      %cst_34 = arith.constant 9.99999997E-7 : f32
      %37 = vector.broadcast %cst_34 : f32 to vector<4x1xf32>
      %38 = arith.addf %36, %37 : vector<4x1xf32>
      %39 = arith.divf %35, %38 : vector<4x1xf32>
      %40 = vector.shape_cast %39 : vector<4x1xf32> to vector<1x4x1xf32>
      %cst_35 = arith.constant dense<0.000000e+00> : vector<1xf32>
      %41 = vector.multi_reduction <add>, %40, %cst_35 [1, 2] : vector<1x4x1xf32> to vector<1xf32>
      %42 = vector.shape_cast %41 : vector<1xf32> to vector<1x1x1xf32>
      %43 = vector.extract %42[0, 0, 0] : f32 from vector<1x1x1xf32>
      %cst_36 = arith.constant 5.000000e-01 : f32
      %44 = arith.mulf %cst_36, %43 : f32
      %cst_37 = arith.constant 1.000000e+00 : f32
      %45 = arith.subf %cst_37, %44 : f32
      %46 = vector.broadcast %45 : f32 to vector<8x128xf32>
      %c0_38 = arith.constant 0 : index
      %c0_39 = arith.constant 0 : index
      %c0_40 = arith.constant 0 : index
      %47 = vector.load %arg4[%c0_38, %c0_39, %c0_40] : memref<1x8x128xf32, #tpu.memory_space<vmem>>, vector<1x8x128xf32>
      %48 = vector.shape_cast %47 : vector<1x8x128xf32> to vector<8x128xf32>
      %49 = vector.shape_cast %46 : vector<8x128xf32> to vector<1x8x128xf32>
      tpu.vector_store %arg4[%c0_38, %c0_39, %c0_40], %49 {strides = array<i32>} : memref<1x8x128xf32, #tpu.memory_space<vmem>>, vector<1x8x128xf32>,
    } else {
    }
    return
  }
  func.func @transform_0(%arg0: i32, %arg1: i32) -> (i32, i32, i32, i32) {
    %c0_i32 = arith.constant 0 : i32
    %c0_i32_0 = arith.constant 0 : i32
    %c0_i32_1 = arith.constant 0 : i32
    return %arg0, %c0_i32, %arg1, %c0_i32_0 : i32, i32, i32, i32
  }
  func.func @transform_1(%arg0: i32, %arg1: i32) -> (i32, i32, i32, i32) {
    %c0_i32 = arith.constant 0 : i32
    %c0_i32_0 = arith.constant 0 : i32
    %c0_i32_1 = arith.constant 0 : i32
    return %arg0, %c0_i32, %arg1, %c0_i32_0 : i32, i32, i32, i32
  }
  func.func @transform_2(%arg0: i32, %arg1: i32) -> (i32, i32, i32) {
    %c0_i32 = arith.constant 0 : i32
    %c0_i32_0 = arith.constant 0 : i32
    %c0_i32_1 = arith.constant 0 : i32
    return %arg0, %c0_i32, %c0_i32_0 : i32, i32, i32
  }
}

</mosaic_0001>

<llo_original>
// kernel: tpu_custom_call.1
$region0: #{tpu_custom_call.1}
  #allocation0 [shape = 'u32[]', space=smem, size = 0x4, offset = 0x4, fixed_abs, tag = 'smem constant byte address 0x4 - core index']
  #allocation1 [shape = 'u32[144,128]{1,0:T(1,128)}', space=vmem, size = 0x12000, scoped, tag = 'internal scratch']
  #allocation2 [shape = 'f32[4,128]{1,0:T(4,128)}', space=vmem, size = 0x800, scoped, tag = 'scratch operand']
  #allocation3 [shape = 'f32[4,128]{1,0:T(4,128)}', space=vmem, size = 0x800, scoped, tag = 'scratch operand']
  #allocation4 [shape = 'f32[4,128]{1,0:T(4,128)}', space=vmem, size = 0x800, scoped, tag = 'scratch operand']
  %s0 = inlined_call_operand.hbm [shape: f32[2,4,4,128], index: 0, kind: input, shape index: {}]
  %s1 = inlined_call_operand.hbm [shape: f32[2,4,4,128], index: 1, kind: input, shape index: {}]
  %s2 = inlined_call_operand.hbm [shape: f32[2,8,128], index: 2, kind: output, shape index: {}]
  %s3 = sld [smem:[#allocation0]]
  $region57: #{tpu_custom_call.1} parent=0
    _
  %s5 = ssub.s32 1, %s3
  %s6 = scalar_select 0, %s5, %s3
  $region1: #{tpu_custom_call.1} parent=0
    #allocation5 [shape = 'u8[16384]{0}', space=vmem, size = 0x4000, scoped, tag = 'input window, operand 0']
    #allocation6 [shape = 's32[2]{0}', space=sflag, size = 0x8, scoped, tag = 'scoped memory for tpu_custom_call.1']
    #allocation7 [shape = 's32[2]{0}', space=sflag, size = 0x8, scoped, tag = 'scoped memory for tpu_custom_call.1']
    #allocation8 [shape = 'u8[16384]{0}', space=vmem, size = 0x4000, scoped, tag = 'input window, operand 1']
    #allocation9 [shape = 's32[2]{0}', space=sflag, size = 0x8, scoped, tag = 'scoped memory for tpu_custom_call.1']
    #allocation10 [shape = 'u8[8192]{0}', space=vmem, size = 0x2000, scoped, tag = 'output window, operand 0']
    %7 = vsyncpa [#allocation6], 0
    %s8 = scalar_lea.sflag [#allocation6], 1
    %9 = vsyncpa %s8, 0
    %10 = vsyncpa [#allocation9], 0
    %s11 = scalar_lea.sflag [#allocation9], 1
    %12 = vsyncpa %s11, 0
    %13 = vsyncpa [#allocation7], 0
    %s14 = scalar_lea.sflag [#allocation7], 1
    %15 = vsyncpa %s14, 0
    loop: start=0, step=1, limit=4
    $region2: #{tpu_custom_call.1} parent=1 // loop_pre_header
      _
    $region3: #{tpu_custom_call.1} parent=1 // loop_header
      %s17 = sphi 0, %s21
      %p18 = scmp.ge.s32.totalorder %s17, 4
      %s24 = sphi 0, %s36
      %s25 = sphi 0, %s32
      %s26 = sphi 0, %s24
      %s27 = sphi 0, %s25
      %s28 = sphi 0, %s26
      %s29 = sphi 0, %s27
      %s41 = sphi 0, %s43
      %s44 = sphi 0, %s41
      %s45 = sphi 0, %s44
      %s61 = sphi 0, %s45
      %s69 = sphi 0, %s71
      %s72 = sphi 0, %s69
      %s73 = sphi 0, %s72
      %s89 = sphi 0, %s73
      %s95 = sphi 0, %s97
      %s98 = sphi 0, %s95
      %s99 = sphi 0, %s98
      %s115 = sphi 0, %s99
    $region4: #{tpu_custom_call.1} parent=1 // loop_header_branch
      %20 = sbr.rel (%p18) target = $region8
    $region5: #{tpu_custom_call.1} parent=1 // loop_body
      %s22 = ssub.s32 %s17, 1
      %s23 = ssub.s32 %s17, 2
      %s30 = sadd.s32 1, %s25
      %p31 = scmp.ge.s32.totalorder %s30, 1
      %s32 = scalar_select %p31, 0, %s30
      %s33 = sadd.s32 1, %s24
      %s34 = scalar_select %p31, %s33, %s24
      %p35 = scmp.ge.s32.totalorder %s34, 2
      %s36 = scalar_select %p35, 0, %s34
      %s37 = ssub.s32 %s24, %s36
      %s38 = ssub.s32 %s25, %s32
      %s39 = sor.u32 %s37, %s38
      %p40 = scmp.eq.s32.totalorder %s39, 0
      %s42 = sadd.s32 %s41, 1
      %s43 = scalar_select %p40, %s41, %s42
      %p46 = pneg %p40
      %p47 = scmp.eq.s32.totalorder %s17, 1
      %p48 = por %p46, %p47
      %p49 = scmp.ne.s32.totalorder %s41, %s44
      %p50 = scmp.eq.s32.totalorder %s17, 0
      %p51 = por %p49, %p50
      %p52 = scmp.ne.s32.totalorder %s41, %s44
      %p53 = scmp.eq.s32.totalorder %s22, 1
      %p54 = por %p52, %p53
      %p55 = scmp.ne.s32.totalorder %s44, %s45
      %p56 = scmp.eq.s32.totalorder %s22, 0
      %p57 = por %p55, %p56
      %p58 = scmp.ne.s32.totalorder %s44, %s45
      %p59 = scmp.eq.s32.totalorder %s23, 1
      %p60 = por %p58, %p59
      %p62 = scmp.ne.s32.totalorder %s45, %s61
      %p63 = scmp.eq.s32.totalorder %s23, 0
      %p64 = por %p62, %p63
      %s65 = ssub.s32 %s24, %s36
      %s66 = ssub.s32 %s25, %s32
      %s67 = sor.u32 %s65, %s66
      %p68 = scmp.eq.s32.totalorder %s67, 0
      %s70 = sadd.s32 %s69, 1
      %s71 = scalar_select %p68, %s69, %s70
      %p74 = pneg %p68
      %p75 = scmp.eq.s32.totalorder %s17, 1
      %p76 = por %p74, %p75
      %p77 = scmp.ne.s32.totalorder %s69, %s72
      %p78 = scmp.eq.s32.totalorder %s17, 0
      %p79 = por %p77, %p78
      %p80 = scmp.ne.s32.totalorder %s69, %s72
      %p81 = scmp.eq.s32.totalorder %s22, 1
      %p82 = por %p80, %p81
      %p83 = scmp.ne.s32.totalorder %s72, %s73
      %p84 = scmp.eq.s32.totalorder %s22, 0
      %p85 = por %p83, %p84
      %p86 = scmp.ne.s32.totalorder %s72, %s73
      %p87 = scmp.eq.s32.totalorder %s23, 1
      %p88 = por %p86, %p87
      %p90 = scmp.ne.s32.totalorder %s73, %s89
      %p91 = scmp.eq.s32.totalorder %s23, 0
      %p92 = por %p90, %p91
      %s93 = ssub.s32 %s24, %s36
      %p94 = scmp.eq.s32.totalorder %s93, 0
      %s96 = sadd.s32 %s95, 1
      %s97 = scalar_select %p94, %s95, %s96
      %p100 = pneg %p94
      %p101 = scmp.eq.s32.totalorder %s17, 1
      %p102 = por %p100, %p101
      %p103 = scmp.ne.s32.totalorder %s95, %s98
      %p104 = scmp.eq.s32.totalorder %s17, 0
      %p105 = por %p103, %p104
      %p106 = scmp.ne.s32.totalorder %s95, %s98
      %p107 = scmp.eq.s32.totalorder %s22, 1
      %p108 = por %p106, %p107
      %p109 = scmp.ne.s32.totalorder %s98, %s99
      %p110 = scmp.eq.s32.totalorder %s22, 0
      %p111 = por %p109, %p110
      %p112 = scmp.ne.s32.totalorder %s98, %s99
      %p113 = scmp.eq.s32.totalorder %s23, 1
      %p114 = por %p112, %p113
      %p116 = scmp.ne.s32.totalorder %s99, %s115
      %p117 = scmp.eq.s32.totalorder %s23, 0
      %p118 = por %p116, %p117
      %p119 = scmp.le.s32.totalorder 1, %s17
      %p120 = scmp.lt.s32.totalorder %s17, 3
      %p121 = pnand %p119, %p120
      %p122 = pneg %p121
      // Predicated region
      $region9: #{tpu_custom_call.1} parent=5 // pred_check
        _
      $region10: #{tpu_custom_call.1} parent=5 // pred_check_branch
        %124 = sbr.rel (%p121) target = $region12
      $region11: #{tpu_custom_call.1} parent=5 // pred_region
        %s125 = ssub.s32 %s17, 1
      $region12: #{tpu_custom_call.1} parent=5 // pred_fallthru
        _
      %p126 = scmp.lt.s32.totalorder %s17, 2
      // Predicated region
      $region13: #{tpu_custom_call.1} parent=5 // pred_check
        %p127 = pneg %p126
      $region14: #{tpu_custom_call.1} parent=5 // pred_check_branch
        %129 = sbr.rel (%p127) target = $region16
      $region15: #{tpu_custom_call.1} parent=5 // pred_region
        // Predicated region
        $region17: #{tpu_custom_call.1} parent=15 // pred_check
          %p130 = pneg %p51
        $region18: #{tpu_custom_call.1} parent=15 // pred_check_branch
          %132 = sbr.rel (%p130) target = $region20
        $region19: #{tpu_custom_call.1} parent=15 // pred_region
          %s133 = sand.u32 %s41, 1
          %s134 = scalar_lea.sflag [#allocation6], %s133
          %s135 = sand.u32 %s41, 1
          %s136 = smul.addr %s135, 16
          %s137 = scalar_lea.vmem [#allocation5], %s136
          %s139 = ssub.s32 256, 256
          %140 = vsyncadd %s134, %s139
          %s141 = smul.addr %s24, 4
          %s142 = sadd.s32 %s25, %s141
          %s143 = smul.addr %s142, 64
          %s144 = scalar_lea.hbm %s0, %s143
          %s145 = sshll.u32 %s137, 4
          %s146 = int_to_ptr.vmem [resolvable:$true] %s145
          %151 = dma.hbm_to_vmem [thread:$0]  %s144, 256, %s146, %s134, 64, 64, 4
        $region20: #{tpu_custom_call.1} parent=15 // pred_fallthru
          _
        // Predicated region
        $region21: #{tpu_custom_call.1} parent=15 // pred_check
          %p152 = pneg %p79
        $region22: #{tpu_custom_call.1} parent=15 // pred_check_branch
          %154 = sbr.rel (%p152) target = $region24
        $region23: #{tpu_custom_call.1} parent=15 // pred_region
          %s155 = sand.u32 %s69, 1
          %s156 = scalar_lea.sflag [#allocation9], %s155
          %s157 = sand.u32 %s69, 1
          %s158 = smul.addr %s157, 16
          %s159 = scalar_lea.vmem [#allocation8], %s158
          %s161 = ssub.s32 256, 256
          %162 = vsyncadd %s156, %s161
          %s163 = smul.addr %s24, 4
          %s164 = sadd.s32 %s25, %s163
          %s165 = smul.addr %s164, 64
          %s166 = scalar_lea.hbm %s1, %s165
          %s167 = sshll.u32 %s159, 4
          %s168 = int_to_ptr.vmem [resolvable:$true] %s167
          %173 = dma.hbm_to_vmem [thread:$0]  %s166, 256, %s168, %s156, 64, 64, 4
        $region24: #{tpu_custom_call.1} parent=15 // pred_fallthru
          _
      $region16: #{tpu_custom_call.1} parent=5 // pred_fallthru
        _
      %p174 = scmp.le.s32.totalorder 1, %s17
      %p175 = scmp.lt.s32.totalorder %s17, 3
      %p176 = pnand %p174, %p175
      %p177 = pneg %p176
      // Predicated region
      $region25: #{tpu_custom_call.1} parent=5 // pred_check
        _
      $region26: #{tpu_custom_call.1} parent=5 // pred_check_branch
        %179 = sbr.rel (%p176) target = $region28
      $region27: #{tpu_custom_call.1} parent=5 // pred_region
        %s180 = ssub.s32 %s17, 1
        %s181 = sand.u32 %s44, 1
        %s182 = scalar_lea.sflag [#allocation6], %s181
        %s183 = sand.u32 %s44, 1
        %s184 = smul.addr %s183, 16
        %s185 = scalar_lea.vmem [#allocation5], %s184
        // Predicated region
        $region29: #{tpu_custom_call.1} parent=27 // pred_check
          %p186 = pneg %p57
        $region30: #{tpu_custom_call.1} parent=27 // pred_check_branch
          %188 = sbr.rel (%p186) target = $region32
        $region31: #{tpu_custom_call.1} parent=27 // pred_region
          %189 = dma.done %s182, 256
        $region32: #{tpu_custom_call.1} parent=27 // pred_fallthru
          _
        %s190 = sand.u32 %s72, 1
        %s191 = scalar_lea.sflag [#allocation9], %s190
        %s192 = sand.u32 %s72, 1
        %s193 = smul.addr %s192, 16
        %s194 = scalar_lea.vmem [#allocation8], %s193
        // Predicated region
        $region33: #{tpu_custom_call.1} parent=27 // pred_check
          %p195 = pneg %p85
        $region34: #{tpu_custom_call.1} parent=27 // pred_check_branch
          %197 = sbr.rel (%p195) target = $region36
        $region35: #{tpu_custom_call.1} parent=27 // pred_region
          %198 = dma.done %s191, 256
        $region36: #{tpu_custom_call.1} parent=27 // pred_fallthru
          _
        %s199 = sand.u32 %s44, 1
        %s200 = scalar_lea.sflag [#allocation6], %s199
        %s201 = sand.u32 %s44, 1
        %s202 = smul.addr %s201, 16
        %s203 = scalar_lea.vmem [#allocation5], %s202
        %p204 = pneg %p57
        %p205 = pneg %p54
        %s206 = sand.u32 %s72, 1
        %s207 = scalar_lea.sflag [#allocation9], %s206
        %s208 = sand.u32 %s72, 1
        %s209 = smul.addr %s208, 16
        %s210 = scalar_lea.vmem [#allocation8], %s209
        %p211 = pneg %p85
        %p212 = pneg %p82
        %p213 = pneg %p111
        %p214 = pneg %p108
        %s215 = sand.u32 %s98, 1
        %s216 = scalar_lea.sflag [#allocation7], %s215
        %s217 = sand.u32 %s98, 1
        %s218 = smul.addr %s217, 8
        %s219 = scalar_lea.vmem [#allocation10], %s218
        %p220 = scmp.eq.s32.totalorder %s27, 0
        // Predicated region
        $region37: #{tpu_custom_call.1} parent=27 // pred_check
          %p221 = pneg %p220
        $region38: #{tpu_custom_call.1} parent=27 // pred_check_branch
          %223 = sbr.rel (%p221) target = $region40
        $region39: #{tpu_custom_call.1} parent=27 // pred_region
          %224 = vst [vmem:[#allocation2] sm:$0xf] 0.0
          %225 = vst [vmem:[#allocation3] sm:$0xf] 0.0
          %226 = vst [vmem:[#allocation4] sm:$0xf] 0.0
        $region40: #{tpu_custom_call.1} parent=27 // pred_fallthru
          _
        %v227 = vld [vmem:[%s185] sm:$0xf]
        %v228 = vld [vmem:[%s185 + $0x4] sm:$0xf]
        %v229 = vld [vmem:[%s185 + $0x8] sm:$0xf]
        %v230 = vld [vmem:[%s185 + $0xc] sm:$0xf]
        %v231 = vld [vmem:[%s194] sm:$0xf]
        %v232 = vld [vmem:[%s194 + $0x4] sm:$0xf]
        %v233 = vld [vmem:[%s194 + $0x8] sm:$0xf]
        %v234 = vld [vmem:[%s194 + $0xc] sm:$0xf]
        %v235 = vld [vmem:[#allocation2] sm:$0xf]
        %v236 = vmul.f32 %v227, %v231
        %v237 = vmul.f32 %v228, %v232
        %v238 = vmul.f32 %v229, %v233
        %v239 = vmul.f32 %v230, %v234
        %vm240 = vcmask 1043456
        %v241 = vsel %vm240, %v236, 0.0
        %v242 = vrot.slane %v241, 4
        %v243 = vadd.f32 %v241, %v242
        %v244 = vrot.slane %v243, 2
        %v245 = vadd.f32 %v243, %v244
        %v246 = vrot.slane %v245, 1
        %v247 = vadd.f32 %v245, %v246
        %v248 = vsel %vm240, %v237, 0.0
        %v249 = vrot.slane %v248, 4
        %v250 = vadd.f32 %v248, %v249
        %v251 = vrot.slane %v250, 2
        %v252 = vadd.f32 %v250, %v251
        %v253 = vrot.slane %v252, 1
        %v254 = vadd.f32 %v252, %v253
        %v255 = vsel %vm240, %v238, 0.0
        %v256 = vrot.slane %v255, 4
        %v257 = vadd.f32 %v255, %v256
        %v258 = vrot.slane %v257, 2
        %v259 = vadd.f32 %v257, %v258
        %v260 = vrot.slane %v259, 1
        %v261 = vadd.f32 %v259, %v260
        %v262 = vsel %vm240, %v239, 0.0
        %v263 = vrot.slane %v262, 4
        %v264 = vadd.f32 %v262, %v263
        %v265 = vrot.slane %v264, 2
        %v266 = vadd.f32 %v264, %v265
        %v267 = vrot.slane %v266, 1
        %v268 = vadd.f32 %v266, %v267
        %vm273 = vcmask 1041409
        %v274 = vsel %vm273, %v254, %v247
        %vm275 = vcmask 1042434
        %v276 = vsel %vm275, %v261, %v274
        %vm277 = vcmask 1043459
        %v278 = vsel %vm277, %v268, %v276
        %v280 = vadd.f32 %v235, %v278
        %281 = vst [vmem:[#allocation2] sm:$0xf] %v280
        %v282 = vld [vmem:[#allocation3] sm:$0xf]
        %v283 = vmul.f32 %v227, %v227
        %v284 = vmul.f32 %v228, %v228
        %v285 = vmul.f32 %v229, %v229
        %v286 = vmul.f32 %v230, %v230
        %v287 = vsel %vm240, %v283, 0.0
        %v288 = vrot.slane %v287, 4
        %v289 = vadd.f32 %v287, %v288
        %v290 = vrot.slane %v289, 2
        %v291 = vadd.f32 %v289, %v290
        %v292 = vrot.slane %v291, 1
        %v293 = vadd.f32 %v291, %v292
        %v294 = vsel %vm240, %v284, 0.0
        %v295 = vrot.slane %v294, 4
        %v296 = vadd.f32 %v294, %v295
        %v297 = vrot.slane %v296, 2
        %v298 = vadd.f32 %v296, %v297
        %v299 = vrot.slane %v298, 1
        %v300 = vadd.f32 %v298, %v299
        %v301 = vsel %vm240, %v285, 0.0
        %v302 = vrot.slane %v301, 4
        %v303 = vadd.f32 %v301, %v302
        %v304 = vrot.slane %v303, 2
        %v305 = vadd.f32 %v303, %v304
        %v306 = vrot.slane %v305, 1
        %v307 = vadd.f32 %v305, %v306
        %v308 = vsel %vm240, %v286, 0.0
        %v309 = vrot.slane %v308, 4
        %v310 = vadd.f32 %v308, %v309
        %v311 = vrot.slane %v310, 2
        %v312 = vadd.f32 %v310, %v311
        %v313 = vrot.slane %v312, 1
        %v314 = vadd.f32 %v312, %v313
        %v319 = vsel %vm273, %v300, %v293
        %v320 = vsel %vm275, %v307, %v319
        %v321 = vsel %vm277, %v314, %v320
        %v323 = vadd.f32 %v282, %v321
        %324 = vst [vmem:[#allocation3] sm:$0xf] %v323
        %v325 = vld [vmem:[#allocation4] sm:$0xf]
        %v326 = vmul.f32 %v231, %v231
        %v327 = vmul.f32 %v232, %v232
        %v328 = vmul.f32 %v233, %v233
        %v329 = vmul.f32 %v234, %v234
        %v330 = vsel %vm240, %v326, 0.0
        %v331 = vrot.slane %v330, 4
        %v332 = vadd.f32 %v330, %v331
        %v333 = vrot.slane %v332, 2
        %v334 = vadd.f32 %v332, %v333
        %v335 = vrot.slane %v334, 1
        %v336 = vadd.f32 %v334, %v335
        %v337 = vsel %vm240, %v327, 0.0
        %v338 = vrot.slane %v337, 4
        %v339 = vadd.f32 %v337, %v338
        %v340 = vrot.slane %v339, 2
        %v341 = vadd.f32 %v339, %v340
        %v342 = vrot.slane %v341, 1
        %v343 = vadd.f32 %v341, %v342
        %v344 = vsel %vm240, %v328, 0.0
        %v345 = vrot.slane %v344, 4
        %v346 = vadd.f32 %v344, %v345
        %v347 = vrot.slane %v346, 2
        %v348 = vadd.f32 %v346, %v347
        %v349 = vrot.slane %v348, 1
        %v350 = vadd.f32 %v348, %v349
        %v351 = vsel %vm240, %v329, 0.0
        %v352 = vrot.slane %v351, 4
        %v353 = vadd.f32 %v351, %v352
        %v354 = vrot.slane %v353, 2
        %v355 = vadd.f32 %v353, %v354
        %v356 = vrot.slane %v355, 1
        %v357 = vadd.f32 %v355, %v356
        %v362 = vsel %vm273, %v343, %v336
        %v363 = vsel %vm275, %v350, %v362
        %v364 = vsel %vm277, %v357, %v363
        %v366 = vadd.f32 %v325, %v364
        %367 = vst [vmem:[#allocation4] sm:$0xf] %v366
        // Predicated region
        $region41: #{tpu_custom_call.1} parent=27 // pred_check
          %p368 = pneg %p220
        $region42: #{tpu_custom_call.1} parent=27 // pred_check_branch
          %370 = sbr.rel (%p368) target = $region44
        $region43: #{tpu_custom_call.1} parent=27 // pred_region
          %v371 = vld [vmem:[#allocation2] sm:$0xf]
          %v372 = vsel %vm240, %v371, 0.0
          %373 = vadd.xlane.f32.xlu0 %v372
          %v374 = vpop.xlane.xlu0 %373
          %v375 = vld [vmem:[#allocation3] sm:$0xf]
          %v376 = vsel %vm240, %v375, 0.0
          %377 = vadd.xlane.f32.xlu0 %v376
          %v378 = vpop.xlane.xlu0 %377
          %v379 = vld [vmem:[#allocation4] sm:$0xf]
          %v380 = vsel %vm240, %v379, 0.0
          %381 = vadd.xlane.f32.xlu0 %v380
          %v382 = vpop.xlane.xlu0 %381
          %v383 = vadd.f32 %v374, 1e-06
          %v384 = vadd.f32 %v378, %v382
          %v385 = vadd.f32 %v384, 1e-06
          %v386 = vrcp.pop %v385
          %v387 = vmul.f32 %v383, %v386
          %vm388 = vcmask 3072
          %v389 = vsel %vm388, %v387, 0.0
          %390 = vadd.xlane.f32.xlu0 %v389
          %v391 = vpop.xlane.xlu0 %390
          %v392 = vrot.slane %v391, 4
          %v393 = vadd.f32 %v391, %v392
          %v394 = vrot.slane %v393, 2
          %v395 = vadd.f32 %v393, %v394
          %v396 = vrot.slane %v395, 1
          %v397 = vadd.f32 %v395, %v396
          %s398 = vtos %v397
          %s399 = smul.f32 %s398, 0.5
          %s400 = ssub.f32 1.0, %s399
          %v401 = vstv %s400
          %402 = vst [vmem:[%s219] sm:$0xff] %v401
        $region44: #{tpu_custom_call.1} parent=27 // pred_fallthru
          _
        %s403 = sand.u32 %s98, 1
        %s404 = scalar_lea.sflag [#allocation7], %s403
        %s405 = sand.u32 %s98, 1
        %s406 = smul.addr %s405, 8
        %s407 = scalar_lea.vmem [#allocation10], %s406
        // Predicated region
        $region45: #{tpu_custom_call.1} parent=27 // pred_check
          %p408 = pneg %p108
        $region46: #{tpu_custom_call.1} parent=27 // pred_check_branch
          %410 = sbr.rel (%p408) target = $region48
        $region47: #{tpu_custom_call.1} parent=27 // pred_region
          %s412 = ssub.s32 128, 128
          %413 = vsyncadd %s404, %s412
          %s414 = smul.addr %s26, 128
          %s415 = scalar_lea.hbm %s2, %s414
          %s417 = sshll.u32 %s407, 4
          %s418 = int_to_ptr.vmem [resolvable:$true] %s417
          %420 = dma.vmem_to_hbm [thread:$0]  %s418, 128, %s415, %s404
        $region48: #{tpu_custom_call.1} parent=27 // pred_fallthru
          _
      $region28: #{tpu_custom_call.1} parent=5 // pred_fallthru
        _
      %p421 = scmp.le.s32.totalorder 2, %s17
      // Predicated region
      $region49: #{tpu_custom_call.1} parent=5 // pred_check
        %p422 = pneg %p421
      $region50: #{tpu_custom_call.1} parent=5 // pred_check_branch
        %424 = sbr.rel (%p422) target = $region52
      $region51: #{tpu_custom_call.1} parent=5 // pred_region
        %s425 = ssub.s32 %s17, 2
        // Predicated region
        $region53: #{tpu_custom_call.1} parent=51 // pred_check
          %p426 = pneg %p114
        $region54: #{tpu_custom_call.1} parent=51 // pred_check_branch
          %428 = sbr.rel (%p426) target = $region56
        $region55: #{tpu_custom_call.1} parent=51 // pred_region
          %s429 = sand.u32 %s99, 1
          %s430 = scalar_lea.sflag [#allocation7], %s429
          %s431 = sand.u32 %s99, 1
          %s432 = smul.addr %s431, 8
          %s433 = scalar_lea.vmem [#allocation10], %s432
          %434 = dma.done %s430, 128
        $region56: #{tpu_custom_call.1} parent=51 // pred_fallthru
          _
      $region52: #{tpu_custom_call.1} parent=5 // pred_fallthru
        _
    $region6: #{tpu_custom_call.1} parent=1 // loop_footer
      %s21 = sadd.s32 1, %s17
    $region7: #{tpu_custom_call.1} parent=1 // loop_footer_branch
      %16 = sbr.rel target = $region3
    $region8: #{tpu_custom_call.1} parent=1 // loop_exit
      _
    %435 = vsyncpa [#allocation6], 1
    %s436 = scalar_lea.sflag [#allocation6], 1
    %437 = vsyncpa %s436, 1
    %438 = vsyncpa [#allocation9], 1
    %s439 = scalar_lea.sflag [#allocation9], 1
    %440 = vsyncpa %s439, 1
    %441 = vsyncpa [#allocation7], 1
    %s442 = scalar_lea.sflag [#allocation7], 1
    %443 = vsyncpa %s442, 1

</llo_original>
